<compile_context>
chip_gen: v5e
topology: v5e:2x2
jax: 0.10.0
libtpu: 0.0.40
codegen_flags: <defaults>
</compile_context>

<pallas_src>
import functools

import jax
import jax.numpy as jnp
from jax import lax
from jax.experimental import pallas as pl
from jax.experimental.pallas import tpu as pltpu


def _round_up(n, m):
    return ((n + m - 1) // m) * m


def lstm_head_kernel(x_ref, slab_ref, h0_ref, c0_ref,
                     logits_ref, h_out_ref, c_out_ref,
                     *, T, B, V, H, D, r_hh, r_w1, r_w2, r_b1, r_b2):
    """one_hot(x) @ M  +  LSTM recurrence  +  linear_1  +  linear_2, fused.

    x_ref    : (T*B, 1) int32, time-major flattened indices.
    slab_ref : (rows, LANES) f32 packed weight slab (single DMA).
    """
    G = 4 * H

    # --- Static sub-views of the packed weight slab (no extra DMAs) ---
    m_tbl = slab_ref[0:V, 0:G]              # renorm(table) @ W_ih.T + b_ih + b_hh
    w_hh = slab_ref[r_hh:r_hh + H, 0:G]     # (H, 4H)
    w1 = slab_ref[r_w1:r_w1 + H, 0:D]       # (H, D)
    w2 = slab_ref[r_w2:r_w2 + D, :]         # (D, LANES)  lane-dense logits weights
    b1 = slab_ref[r_b1:r_b1 + 1, 0:D]       # (1, D)
    b2 = slab_ref[r_b2:r_b2 + 1, :]         # (1, LANES)

    # --- 2D one-hot (time-major rows) + ONE hoisted input projection ---
    idx = x_ref[...]                                                  # (T*B, 1)
    onehot = (idx == lax.broadcasted_iota(jnp.int32, (T * B, V), 1)
              ).astype(jnp.float32)                                   # (T*B, V)
    xw = jnp.dot(onehot, m_tbl, preferred_element_type=jnp.float32)   # (T*B, 4H)
    xw = xw.reshape(T, B, G)                                          # time-major

    h = h0_ref[...]                                                   # (B, H)
    c = c0_ref[...]                                                   # (B, H)

    # --- Unrolled recurrence: only h @ W_hh (+add) is on the serial chain ---
    for t in range(T):
        gates = xw[t] + jnp.dot(h, w_hh,
                                preferred_element_type=jnp.float32)   # (B, 4H)
        sig = jax.nn.sigmoid(gates)        # one whole-vreg EUP pass
        tnh = jnp.tanh(gates)              # one whole-vreg EUP pass
        i_g = sig[:, 0:H]                  # PyTorch gate order: i, f, g, o
        f_g = sig[:, H:2 * H]
        g_g = tnh[:, 2 * H:3 * H]
        o_g = sig[:, 3 * H:4 * H]
        c = f_g * c + i_g * g_g
        h = o_g * jnp.tanh(c)

    # n_layers == 1  =>  h.mean(dim=0) == h
    x1 = jnp.dot(h, w1, preferred_element_type=jnp.float32) + b1      # (B, D)
    logits_ref[...] = jnp.dot(x1, w2,
                              preferred_element_type=jnp.float32) + b2  # (B, LANES)
    h_out_ref[...] = h
    c_out_ref[...] = c


class Network:
    """JAX/Pallas port of the PyTorch `Network` module (n_layers fixed to 1)."""

    def __init__(self, vocab_size, embedding_dim=2, dense_dim=32, hidden_dim=8,
                 max_norm=2.0, n_layers=1, seed=0):
        assert n_layers == 1, "this port implements the default n_layers=1"
        self.vocab_size = vocab_size
        self.embedding_dim = embedding_dim
        self.dense_dim = dense_dim
        self.hidden_dim = hidden_dim
        self.max_norm = float(max_norm)
        self.n_layers = n_layers
        self.padding_idx = vocab_size - 1

        keys = jax.random.split(jax.random.PRNGKey(seed), 9)
        H, E, D, V = hidden_dim, embedding_dim, dense_dim, vocab_size
        G = 4 * H

        # Embedding ~ N(0, 1), padding row zeroed (PyTorch behaviour).
        table = jax.random.normal(keys[0], (V, E), jnp.float32)
        self.embedding = table.at[self.padding_idx].set(0.0)

        # LSTM params, uniform(-1/sqrt(H), 1/sqrt(H)) like PyTorch.
        k = 1.0 / jnp.sqrt(jnp.float32(H))
        u = lambda key, shape: jax.random.uniform(key, shape, jnp.float32, -k, k)
        self.w_ih = u(keys[1], (G, E))          # PyTorch weight_ih_l0
        self.w_hh = u(keys[2], (G, H))          # PyTorch weight_hh_l0
        self.b_ih = u(keys[3], (G,))
        self.b_hh = u(keys[4], (G,))

        # linear_1: H -> D
        k1 = 1.0 / jnp.sqrt(jnp.float32(H))
        self.w1 = jax.random.uniform(keys[5], (D, H), jnp.float32, -k1, k1)
        self.b1 = jax.random.uniform(keys[6], (D,), jnp.float32, -k1, k1)
        # linear_2: D -> V
        k2 = 1.0 / jnp.sqrt(jnp.float32(D))
        self.w2 = jax.random.uniform(keys[7], (V, D), jnp.float32, -k2, k2)
        self.b2 = jax.random.uniform(keys[8], (V,), jnp.float32, -k2, k2)

        # ---- One-time precompute: max_norm renorm + input projection + bias ----
        # one_hot(x) @ M == embedding(x) @ W_ih.T + b_ih + b_hh   (exact)
        norms = jnp.sqrt(jnp.sum(self.embedding * self.embedding,
                                 axis=-1, keepdims=True))              # (V, 1)
        scale = jnp.where(norms > self.max_norm,
                          self.max_norm / (norms + 1e-7), 1.0)
        table_rn = self.embedding * scale
        m_tbl = (jnp.dot(table_rn, self.w_ih.T)
                 + (self.b_ih + self.b_hh)[None, :])                   # (V, 4H)

        # ---- Pack ALL weights into one lane-dense f32 slab (single DMA/call) ----
        lanes = _round_up(max(G, D, V, 1), 128)
        assert D <= lanes and G <= lanes and V <= lanes
        r_hh = _round_up(V, 8)
        r_w1 = r_hh + _round_up(H, 8)
        r_w2 = r_w1 + _round_up(H, 8)
        r_b1 = r_w2 + _round_up(D, 8)
        r_b2 = r_b1 + 1
        rows = _round_up(r_b2 + 1, 8)

        slab = jnp.zeros((rows, lanes), jnp.float32)
        slab = slab.at[0:V, 0:G].set(m_tbl)
        slab = slab.at[r_hh:r_hh + H, 0:G].set(self.w_hh.T)
        slab = slab.at[r_w1:r_w1 + H, 0:D].set(self.w1.T)
        slab = slab.at[r_w2:r_w2 + D, 0:V].set(self.w2.T)
        slab = slab.at[r_b1, 0:D].set(self.b1)
        slab = slab.at[r_b2, 0:V].set(self.b2)
        self.slab = slab

        self._lanes = lanes
        self._r_hh, self._r_w1, self._r_w2 = r_hh, r_w1, r_w2
        self._r_b1, self._r_b2 = r_b1, r_b2

        self._forward = jax.jit(self._forward_impl)

    def _forward_impl(self, x, h0, c0):
        B, T = x.shape
        H, D, V = self.hidden_dim, self.dense_dim, self.vocab_size

        # Time-major flattened indices (layout plumbing only).
        x_tm = x.T.reshape(T * B, 1)

        vmem = pl.BlockSpec(memory_space=pltpu.MemorySpace.VMEM)
        kernel = functools.partial(
            lstm_head_kernel, T=T, B=B, V=V, H=H, D=D,
            r_hh=self._r_hh, r_w1=self._r_w1, r_w2=self._r_w2,
            r_b1=self._r_b1, r_b2=self._r_b2)

        logits_p, h_fin, c_fin = pl.pallas_call(
            kernel,
            out_shape=(
                jax.ShapeDtypeStruct((B, self._lanes), jnp.float32),
                jax.ShapeDtypeStruct((B, H), jnp.float32),
                jax.ShapeDtypeStruct((B, H), jnp.float32),
            ),
            in_specs=[vmem, vmem, vmem, vmem],
            out_specs=(vmem, vmem, vmem),
        )(x_tm, self.slab, h0, c0)

        # PyTorch returns h, c with shape (n_layers, B, H); drop logits lane padding.
        return logits_p[:, :V], h_fin[None, ...], c_fin[None, ...]

    def __call__(self, x, h=None, c=None):
        """x: int array (n_samples, window_size). Returns (logits, h, c)."""
        x = jnp.asarray(x, jnp.int32)
        B = x.shape[0]
        H = self.hidden_dim

        if h is not None and c is not None:
            h0 = jnp.asarray(h, jnp.float32)[0]     # (B, H)
            c0 = jnp.asarray(c, jnp.float32)[0]
        else:
            h0 = jnp.zeros((B, H), jnp.float32)
            c0 = jnp.zeros((B, H), jnp.float32)

        return self._forward(x, h0, c0)


if __name__ == "__main__":
    vocab_size = 16
    batch, window = 2, 8

    net = Network(vocab_size=vocab_size, embedding_dim=2, dense_dim=32,
                  hidden_dim=8, max_norm=2, n_layers=1, seed=0)

    key = jax.random.PRNGKey(0)
    x = jax.random.randint(key, (batch, window), 0, vocab_size, dtype=jnp.int32)

    logits, h, c = net(x)
    jax.block_until_ready((logits, h, c))

    assert logits.shape == (batch, vocab_size)
    assert h.shape == (1, batch, 8)
    assert c.shape == (1, batch, 8)

    # Second call feeding the state back in (exercises the h/c branch).
    logits2, h2, c2 = net(x, h, c)
    jax.block_until_ready((logits2, h2, c2))
    assert logits2.shape == (batch, vocab_size)

    print("KERNEL_OK")
</pallas_src>

<mosaic_0001>
module attributes {stable_mosaic.version = 11 : i64} {
  func.func @lstm_head_kernel(%arg0: memref<16x1xi32, #tpu.memory_space<vmem>>, %arg1: memref<72x128xf32, #tpu.memory_space<vmem>>, %arg2: memref<2x8xf32, #tpu.memory_space<vmem>>, %arg3: memref<2x8xf32, #tpu.memory_space<vmem>>, %arg4: memref<2x128xf32, #tpu.memory_space<vmem>>, %arg5: memref<2x8xf32, #tpu.memory_space<vmem>>, %arg6: memref<2x8xf32, #tpu.memory_space<vmem>>) attributes {dimension_semantics = [], scalar_prefetch = 0 : i64, scratch_operands = 0 : i64, tpu.core_type = #tpu.core_type<tc>} {
    %c0 = arith.constant 0 : index
    %c0_0 = arith.constant 0 : index
    %0 = vector.load %arg1[%c0, %c0_0] : memref<72x128xf32, #tpu.memory_space<vmem>>, vector<16x32xf32>
    %c16 = arith.constant 16 : index
    %c0_1 = arith.constant 0 : index
    %1 = vector.load %arg1[%c16, %c0_1] : memref<72x128xf32, #tpu.memory_space<vmem>>, vector<8x32xf32>
    %c24 = arith.constant 24 : index
    %c0_2 = arith.constant 0 : index
    %2 = vector.load %arg1[%c24, %c0_2] : memref<72x128xf32, #tpu.memory_space<vmem>>, vector<8x32xf32>
    %c32 = arith.constant 32 : index
    %c0_3 = arith.constant 0 : index
    %3 = vector.load %arg1[%c32, %c0_3] : memref<72x128xf32, #tpu.memory_space<vmem>>, vector<32x128xf32>
    %c64 = arith.constant 64 : index
    %c0_4 = arith.constant 0 : index
    %4 = vector.load %arg1[%c64, %c0_4] : memref<72x128xf32, #tpu.memory_space<vmem>>, vector<1x32xf32>
    %c65 = arith.constant 65 : index
    %c0_5 = arith.constant 0 : index
    %5 = vector.load %arg1[%c65, %c0_5] : memref<72x128xf32, #tpu.memory_space<vmem>>, vector<1x128xf32>
    %c0_6 = arith.constant 0 : index
    %c0_7 = arith.constant 0 : index
    %6 = vector.load %arg0[%c0_6, %c0_7] : memref<16x1xi32, #tpu.memory_space<vmem>>, vector<16x1xi32>
    %7 = tpu.iota {dimensions = array<i32: 1>} : vector<16x16xi32>
    %8 = vector.broadcast %6 : vector<16x1xi32> to vector<16x16xi32>
    %9 = arith.cmpi eq, %8, %7 : vector<16x16xi32>
    %10 = arith.extui %9 : vector<16x16xi1> to vector<16x16xi32>
    %11 = arith.sitofp %10 : vector<16x16xi32> to vector<16x16xf32>
    %cst = arith.constant dense<0.000000e+00> : vector<16x32xf32>
    %12 = tpu.matmul %11, %0, %cst {dimension_numbers = #tpu.dot_dimension_numbers<[1], [0], [0], [1], [0, 0, 1, 1], [], []>} : vector<16x16xf32>, vector<16x32xf32>, vector<16x32xf32> -> vector<16x32xf32>
    %13 = vector.shape_cast %12 : vector<16x32xf32> to vector<8x2x32xf32>
    %c0_8 = arith.constant 0 : index
    %c0_9 = arith.constant 0 : index
    %14 = vector.load %arg2[%c0_8, %c0_9] : memref<2x8xf32, #tpu.memory_space<vmem>>, vector<2x8xf32>
    %c0_10 = arith.constant 0 : index
    %c0_11 = arith.constant 0 : index
    %15 = vector.load %arg3[%c0_10, %c0_11] : memref<2x8xf32, #tpu.memory_space<vmem>>, vector<2x8xf32>
    %16 = vector.extract_strided_slice %13 {offsets = [0, 0, 0], sizes = [1, 2, 32], strides = [1, 1, 1]} : vector<8x2x32xf32> to vector<1x2x32xf32>
    %17 = vector.shape_cast %16 : vector<1x2x32xf32> to vector<2x32xf32>
    %cst_12 = arith.constant dense<0.000000e+00> : vector<2x32xf32>
    %18 = tpu.matmul %14, %1, %cst_12 {dimension_numbers = #tpu.dot_dimension_numbers<[1], [0], [0], [1], [0, 0, 1, 1], [], []>} : vector<2x8xf32>, vector<8x32xf32>, vector<2x32xf32> -> vector<2x32xf32>
    %19 = arith.addf %17, %18 : vector<2x32xf32>
    %20 = arith.negf %19 : vector<2x32xf32>
    %21 = math.exp %20 : vector<2x32xf32>
    %cst_13 = arith.constant 1.000000e+00 : f32
    %22 = vector.broadcast %cst_13 : f32 to vector<2x32xf32>
    %23 = arith.addf %22, %21 : vector<2x32xf32>
    %24 = arith.divf %22, %23 : vector<2x32xf32>
    %25 = math.tanh %19 : vector<2x32xf32>
    %26 = vector.extract_strided_slice %24 {offsets = [0, 0], sizes = [2, 8], strides = [1, 1]} : vector<2x32xf32> to vector<2x8xf32>
    %27 = vector.extract_strided_slice %24 {offsets = [0, 8], sizes = [2, 8], strides = [1, 1]} : vector<2x32xf32> to vector<2x8xf32>
    %28 = vector.extract_strided_slice %25 {offsets = [0, 16], sizes = [2, 8], strides = [1, 1]} : vector<2x32xf32> to vector<2x8xf32>
    %29 = vector.extract_strided_slice %24 {offsets = [0, 24], sizes = [2, 8], strides = [1, 1]} : vector<2x32xf32> to vector<2x8xf32>
    %30 = arith.mulf %27, %15 : vector<2x8xf32>
    %31 = arith.mulf %26, %28 : vector<2x8xf32>
    %32 = arith.addf %30, %31 : vector<2x8xf32>
    %33 = math.tanh %32 : vector<2x8xf32>
    %34 = arith.mulf %29, %33 : vector<2x8xf32>
    %35 = vector.extract_strided_slice %13 {offsets = [1, 0, 0], sizes = [1, 2, 32], strides = [1, 1, 1]} : vector<8x2x32xf32> to vector<1x2x32xf32>
    %36 = vector.shape_cast %35 : vector<1x2x32xf32> to vector<2x32xf32>
    %cst_14 = arith.constant dense<0.000000e+00> : vector<2x32xf32>
    %37 = tpu.matmul %34, %1, %cst_14 {dimension_numbers = #tpu.dot_dimension_numbers<[1], [0], [0], [1], [0, 0, 1, 1], [], []>} : vector<2x8xf32>, vector<8x32xf32>, vector<2x32xf32> -> vector<2x32xf32>
    %38 = arith.addf %36, %37 : vector<2x32xf32>
    %39 = arith.negf %38 : vector<2x32xf32>
    %40 = math.exp %39 : vector<2x32xf32>
    %cst_15 = arith.constant 1.000000e+00 : f32
    %41 = vector.broadcast %cst_15 : f32 to vector<2x32xf32>
    %42 = arith.addf %41, %40 : vector<2x32xf32>
    %43 = arith.divf %41, %42 : vector<2x32xf32>
    %44 = math.tanh %38 : vector<2x32xf32>
    %45 = vector.extract_strided_slice %43 {offsets = [0, 0], sizes = [2, 8], strides = [1, 1]} : vector<2x32xf32> to vector<2x8xf32>
    %46 = vector.extract_strided_slice %43 {offsets = [0, 8], sizes = [2, 8], strides = [1, 1]} : vector<2x32xf32> to vector<2x8xf32>
    %47 = vector.extract_strided_slice %44 {offsets = [0, 16], sizes = [2, 8], strides = [1, 1]} : vector<2x32xf32> to vector<2x8xf32>
    %48 = vector.extract_strided_slice %43 {offsets = [0, 24], sizes = [2, 8], strides = [1, 1]} : vector<2x32xf32> to vector<2x8xf32>
    %49 = arith.mulf %46, %32 : vector<2x8xf32>
    %50 = arith.mulf %45, %47 : vector<2x8xf32>
    %51 = arith.addf %49, %50 : vector<2x8xf32>
    %52 = math.tanh %51 : vector<2x8xf32>
    %53 = arith.mulf %48, %52 : vector<2x8xf32>
    %54 = vector.extract_strided_slice %13 {offsets = [2, 0, 0], sizes = [1, 2, 32], strides = [1, 1, 1]} : vector<8x2x32xf32> to vector<1x2x32xf32>
    %55 = vector.shape_cast %54 : vector<1x2x32xf32> to vector<2x32xf32>
    %cst_16 = arith.constant dense<0.000000e+00> : vector<2x32xf32>
    %56 = tpu.matmul %53, %1, %cst_16 {dimension_numbers = #tpu.dot_dimension_numbers<[1], [0], [0], [1], [0, 0, 1, 1], [], []>} : vector<2x8xf32>, vector<8x32xf32>, vector<2x32xf32> -> vector<2x32xf32>
    %57 = arith.addf %55, %56 : vector<2x32xf32>
    %58 = arith.negf %57 : vector<2x32xf32>
    %59 = math.exp %58 : vector<2x32xf32>
    %cst_17 = arith.constant 1.000000e+00 : f32
    %60 = vector.broadcast %cst_17 : f32 to vector<2x32xf32>
    %61 = arith.addf %60, %59 : vector<2x32xf32>
    %62 = arith.divf %60, %61 : vector<2x32xf32>
    %63 = math.tanh %57 : vector<2x32xf32>
    %64 = vector.extract_strided_slice %62 {offsets = [0, 0], sizes = [2, 8], strides = [1, 1]} : vector<2x32xf32> to vector<2x8xf32>
    %65 = vector.extract_strided_slice %62 {offsets = [0, 8], sizes = [2, 8], strides = [1, 1]} : vector<2x32xf32> to vector<2x8xf32>
    %66 = vector.extract_strided_slice %63 {offsets = [0, 16], sizes = [2, 8], strides = [1, 1]} : vector<2x32xf32> to vector<2x8xf32>
    %67 = vector.extract_strided_slice %62 {offsets = [0, 24], sizes = [2, 8], strides = [1, 1]} : vector<2x32xf32> to vector<2x8xf32>
    %68 = arith.mulf %65, %51 : vector<2x8xf32>
    %69 = arith.mulf %64, %66 : vector<2x8xf32>
    %70 = arith.addf %68, %69 : vector<2x8xf32>
    %71 = math.tanh %70 : vector<2x8xf32>
    %72 = arith.mulf %67, %71 : vector<2x8xf32>
    %73 = vector.extract_strided_slice %13 {offsets = [3, 0, 0], sizes = [1, 2, 32], strides = [1, 1, 1]} : vector<8x2x32xf32> to vector<1x2x32xf32>
    %74 = vector.shape_cast %73 : vector<1x2x32xf32> to vector<2x32xf32>
    %cst_18 = arith.constant dense<0.000000e+00> : vector<2x32xf32>
    %75 = tpu.matmul %72, %1, %cst_18 {dimension_numbers = #tpu.dot_dimension_numbers<[1], [0], [0], [1], [0, 0, 1, 1], [], []>} : vector<2x8xf32>, vector<8x32xf32>, vector<2x32xf32> -> vector<2x32xf32>
    %76 = arith.addf %74, %75 : vector<2x32xf32>
    %77 = arith.negf %76 : vector<2x32xf32>
    %78 = math.exp %77 : vector<2x32xf32>
    %cst_19 = arith.constant 1.000000e+00 : f32
    %79 = vector.broadcast %cst_19 : f32 to vector<2x32xf32>
    %80 = arith.addf %79, %78 : vector<2x32xf32>
    %81 = arith.divf %79, %80 : vector<2x32xf32>
    %82 = math.tanh %76 : vector<2x32xf32>
    %83 = vector.extract_strided_slice %81 {offsets = [0, 0], sizes = [2, 8], strides = [1, 1]} : vector<2x32xf32> to vector<2x8xf32>
    %84 = vector.extract_strided_slice %81 {offsets = [0, 8], sizes = [2, 8], strides = [1, 1]} : vector<2x32xf32> to vector<2x8xf32>
    %85 = vector.extract_strided_slice %82 {offsets = [0, 16], sizes = [2, 8], strides = [1, 1]} : vector<2x32xf32> to vector<2x8xf32>
    %86 = vector.extract_strided_slice %81 {offsets = [0, 24], sizes = [2, 8], strides = [1, 1]} : vector<2x32xf32> to vector<2x8xf32>
    %87 = arith.mulf %84, %70 : vector<2x8xf32>
    %88 = arith.mulf %83, %85 : vector<2x8xf32>
    %89 = arith.addf %87, %88 : vector<2x8xf32>
    %90 = math.tanh %89 : vector<2x8xf32>
    %91 = arith.mulf %86, %90 : vector<2x8xf32>
    %92 = vector.extract_strided_slice %13 {offsets = [4, 0, 0], sizes = [1, 2, 32], strides = [1, 1, 1]} : vector<8x2x32xf32> to vector<1x2x32xf32>
    %93 = vector.shape_cast %92 : vector<1x2x32xf32> to vector<2x32xf32>
    %cst_20 = arith.constant dense<0.000000e+00> : vector<2x32xf32>
    %94 = tpu.matmul %91, %1, %cst_20 {dimension_numbers = #tpu.dot_dimension_numbers<[1], [0], [0], [1], [0, 0, 1, 1], [], []>} : vector<2x8xf32>, vector<8x32xf32>, vector<2x32xf32> -> vector<2x32xf32>
    %95 = arith.addf %93, %94 : vector<2x32xf32>
    %96 = arith.negf %95 : vector<2x32xf32>
    %97 = math.exp %96 : vector<2x32xf32>
    %cst_21 = arith.constant 1.000000e+00 : f32
    %98 = vector.broadcast %cst_21 : f32 to vector<2x32xf32>
    %99 = arith.addf %98, %97 : vector<2x32xf32>
    %100 = arith.divf %98, %99 : vector<2x32xf32>
    %101 = math.tanh %95 : vector<2x32xf32>
    %102 = vector.extract_strided_slice %100 {offsets = [0, 0], sizes = [2, 8], strides = [1, 1]} : vector<2x32xf32> to vector<2x8xf32>
    %103 = vector.extract_strided_slice %100 {offsets = [0, 8], sizes = [2, 8], strides = [1, 1]} : vector<2x32xf32> to vector<2x8xf32>
    %104 = vector.extract_strided_slice %101 {offsets = [0, 16], sizes = [2, 8], strides = [1, 1]} : vector<2x32xf32> to vector<2x8xf32>
    %105 = vector.extract_strided_slice %100 {offsets = [0, 24], sizes = [2, 8], strides = [1, 1]} : vector<2x32xf32> to vector<2x8xf32>
    %106 = arith.mulf %103, %89 : vector<2x8xf32>
    %107 = arith.mulf %102, %104 : vector<2x8xf32>
    %108 = arith.addf %106, %107 : vector<2x8xf32>
    %109 = math.tanh %108 : vector<2x8xf32>
    %110 = arith.mulf %105, %109 : vector<2x8xf32>
    %111 = vector.extract_strided_slice %13 {offsets = [5, 0, 0], sizes = [1, 2, 32], strides = [1, 1, 1]} : vector<8x2x32xf32> to vector<1x2x32xf32>
    %112 = vector.shape_cast %111 : vector<1x2x32xf32> to vector<2x32xf32>
    %cst_22 = arith.constant dense<0.000000e+00> : vector<2x32xf32>
    %113 = tpu.matmul %110, %1, %cst_22 {dimension_numbers = #tpu.dot_dimension_numbers<[1], [0], [0], [1], [0, 0, 1, 1], [], []>} : vector<2x8xf32>, vector<8x32xf32>, vector<2x32xf32> -> vector<2x32xf32>
    %114 = arith.addf %112, %113 : vector<2x32xf32>
    %115 = arith.negf %114 : vector<2x32xf32>
    %116 = math.exp %115 : vector<2x32xf32>
    %cst_23 = arith.constant 1.000000e+00 : f32
    %117 = vector.broadcast %cst_23 : f32 to vector<2x32xf32>
    %118 = arith.addf %117, %116 : vector<2x32xf32>
    %119 = arith.divf %117, %118 : vector<2x32xf32>
    %120 = math.tanh %114 : vector<2x32xf32>
    %121 = vector.extract_strided_slice %119 {offsets = [0, 0], sizes = [2, 8], strides = [1, 1]} : vector<2x32xf32> to vector<2x8xf32>
    %122 = vector.extract_strided_slice %119 {offsets = [0, 8], sizes = [2, 8], strides = [1, 1]} : vector<2x32xf32> to vector<2x8xf32>
    %123 = vector.extract_strided_slice %120 {offsets = [0, 16], sizes = [2, 8], strides = [1, 1]} : vector<2x32xf32> to vector<2x8xf32>
    %124 = vector.extract_strided_slice %119 {offsets = [0, 24], sizes = [2, 8], strides = [1, 1]} : vector<2x32xf32> to vector<2x8xf32>
    %125 = arith.mulf %122, %108 : vector<2x8xf32>
    %126 = arith.mulf %121, %123 : vector<2x8xf32>
    %127 = arith.addf %125, %126 : vector<2x8xf32>
    %128 = math.tanh %127 : vector<2x8xf32>
    %129 = arith.mulf %124, %128 : vector<2x8xf32>
    %130 = vector.extract_strided_slice %13 {offsets = [6, 0, 0], sizes = [1, 2, 32], strides = [1, 1, 1]} : vector<8x2x32xf32> to vector<1x2x32xf32>
    %131 = vector.shape_cast %130 : vector<1x2x32xf32> to vector<2x32xf32>
    %cst_24 = arith.constant dense<0.000000e+00> : vector<2x32xf32>
    %132 = tpu.matmul %129, %1, %cst_24 {dimension_numbers = #tpu.dot_dimension_numbers<[1], [0], [0], [1], [0, 0, 1, 1], [], []>} : vector<2x8xf32>, vector<8x32xf32>, vector<2x32xf32> -> vector<2x32xf32>
    %133 = arith.addf %131, %132 : vector<2x32xf32>
    %134 = arith.negf %133 : vector<2x32xf32>
    %135 = math.exp %134 : vector<2x32xf32>
    %cst_25 = arith.constant 1.000000e+00 : f32
    %136 = vector.broadcast %cst_25 : f32 to vector<2x32xf32>
    %137 = arith.addf %136, %135 : vector<2x32xf32>
    %138 = arith.divf %136, %137 : vector<2x32xf32>
    %139 = math.tanh %133 : vector<2x32xf32>
    %140 = vector.extract_strided_slice %138 {offsets = [0, 0], sizes = [2, 8], strides = [1, 1]} : vector<2x32xf32> to vector<2x8xf32>
    %141 = vector.extract_strided_slice %138 {offsets = [0, 8], sizes = [2, 8], strides = [1, 1]} : vector<2x32xf32> to vector<2x8xf32>
    %142 = vector.extract_strided_slice %139 {offsets = [0, 16], sizes = [2, 8], strides = [1, 1]} : vector<2x32xf32> to vector<2x8xf32>
    %143 = vector.extract_strided_slice %138 {offsets = [0, 24], sizes = [2, 8], strides = [1, 1]} : vector<2x32xf32> to vector<2x8xf32>
    %144 = arith.mulf %141, %127 : vector<2x8xf32>
    %145 = arith.mulf %140, %142 : vector<2x8xf32>
    %146 = arith.addf %144, %145 : vector<2x8xf32>
    %147 = math.tanh %146 : vector<2x8xf32>
    %148 = arith.mulf %143, %147 : vector<2x8xf32>
    %149 = vector.extract_strided_slice %13 {offsets = [7, 0, 0], sizes = [1, 2, 32], strides = [1, 1, 1]} : vector<8x2x32xf32> to vector<1x2x32xf32>
    %150 = vector.shape_cast %149 : vector<1x2x32xf32> to vector<2x32xf32>
    %cst_26 = arith.constant dense<0.000000e+00> : vector<2x32xf32>
    %151 = tpu.matmul %148, %1, %cst_26 {dimension_numbers = #tpu.dot_dimension_numbers<[1], [0], [0], [1], [0, 0, 1, 1], [], []>} : vector<2x8xf32>, vector<8x32xf32>, vector<2x32xf32> -> vector<2x32xf32>
    %152 = arith.addf %150, %151 : vector<2x32xf32>
    %153 = arith.negf %152 : vector<2x32xf32>
    %154 = math.exp %153 : vector<2x32xf32>
    %cst_27 = arith.constant 1.000000e+00 : f32
    %155 = vector.broadcast %cst_27 : f32 to vector<2x32xf32>
    %156 = arith.addf %155, %154 : vector<2x32xf32>
    %157 = arith.divf %155, %156 : vector<2x32xf32>
    %158 = math.tanh %152 : vector<2x32xf32>
    %159 = vector.extract_strided_slice %157 {offsets = [0, 0], sizes = [2, 8], strides = [1, 1]} : vector<2x32xf32> to vector<2x8xf32>
    %160 = vector.extract_strided_slice %157 {offsets = [0, 8], sizes = [2, 8], strides = [1, 1]} : vector<2x32xf32> to vector<2x8xf32>
    %161 = vector.extract_strided_slice %158 {offsets = [0, 16], sizes = [2, 8], strides = [1, 1]} : vector<2x32xf32> to vector<2x8xf32>
    %162 = vector.extract_strided_slice %157 {offsets = [0, 24], sizes = [2, 8], strides = [1, 1]} : vector<2x32xf32> to vector<2x8xf32>
    %163 = arith.mulf %160, %146 : vector<2x8xf32>
    %164 = arith.mulf %159, %161 : vector<2x8xf32>
    %165 = arith.addf %163, %164 : vector<2x8xf32>
    %166 = math.tanh %165 : vector<2x8xf32>
    %167 = arith.mulf %162, %166 : vector<2x8xf32>
    %cst_28 = arith.constant dense<0.000000e+00> : vector<2x32xf32>
    %168 = tpu.matmul %167, %2, %cst_28 {dimension_numbers = #tpu.dot_dimension_numbers<[1], [0], [0], [1], [0, 0, 1, 1], [], []>} : vector<2x8xf32>, vector<8x32xf32>, vector<2x32xf32> -> vector<2x32xf32>
    %169 = vector.broadcast %4 : vector<1x32xf32> to vector<2x32xf32>
    %170 = arith.addf %168, %169 : vector<2x32xf32>
    %cst_29 = arith.constant dense<0.000000e+00> : vector<2x128xf32>
    %171 = tpu.matmul %170, %3, %cst_29 {dimension_numbers = #tpu.dot_dimension_numbers<[1], [0], [0], [1], [0, 0, 1, 1], [], []>} : vector<2x32xf32>, vector<32x128xf32>, vector<2x128xf32> -> vector<2x128xf32>
    %172 = vector.broadcast %5 : vector<1x128xf32> to vector<2x128xf32>
    %173 = arith.addf %171, %172 : vector<2x128xf32>
    %c0_30 = arith.constant 0 : index
    %c0_31 = arith.constant 0 : index
    %174 = vector.load %arg4[%c0_30, %c0_31] : memref<2x128xf32, #tpu.memory_space<vmem>>, vector<2x128xf32>
    tpu.vector_store %arg4[%c0_30, %c0_31], %173 {strides = array<i32>} : memref<2x128xf32, #tpu.memory_space<vmem>>, vector<2x128xf32>,
    %c0_32 = arith.constant 0 : index
    %c0_33 = arith.constant 0 : index
    %175 = vector.load %arg5[%c0_32, %c0_33] : memref<2x8xf32, #tpu.memory_space<vmem>>, vector<2x8xf32>
    tpu.vector_store %arg5[%c0_32, %c0_33], %167 {strides = array<i32>} : memref<2x8xf32, #tpu.memory_space<vmem>>, vector<2x8xf32>,
    %c0_34 = arith.constant 0 : index
    %c0_35 = arith.constant 0 : index
    %176 = vector.load %arg6[%c0_34, %c0_35] : memref<2x8xf32, #tpu.memory_space<vmem>>, vector<2x8xf32>
    tpu.vector_store %arg6[%c0_34, %c0_35], %165 {strides = array<i32>} : memref<2x8xf32, #tpu.memory_space<vmem>>, vector<2x8xf32>,
    return
  }
}

</mosaic_0001>

<llo_original>
// kernel: _forward_impl.1
$region0: #{_forward_impl.1}
  #allocation0 [shape = 'u32[]', space=smem, size = 0x4, offset = 0x4, fixed_abs, tag = 'smem constant byte address 0x4 - core index']
  #allocation1 [shape = 'u32[72,128]{1,0:T(1,128)}', space=vmem, size = 0x9000, scoped, tag = 'internal scratch']
  %s0 = inlined_call_operand.vmem [shape: s32[16,1], index: 0, kind: input, shape index: {}]
  %s1 = inlined_call_operand.hbm [shape: f32[72,128], index: 1, kind: input, shape index: {}]
  %s2 = inlined_call_operand.vmem [shape: f32[2,8], index: 2, kind: input, shape index: {}]
  %s3 = inlined_call_operand.vmem [shape: f32[2,8], index: 3, kind: input, shape index: {}]
  %s4 = inlined_call_operand.hbm [shape: f32[2,128], index: 4, kind: output, shape index: {0}]
  %s5 = inlined_call_operand.hbm [shape: f32[2,8], index: 5, kind: output, shape index: {1}]
  %s6 = inlined_call_operand.hbm [shape: f32[2,8], index: 6, kind: output, shape index: {2}]
  %7 = xla_tuple %s4, %s5, %s6
  %s8 = sld [smem:[#allocation0]]
  $region46: #{_forward_impl.1} parent=0
    _
  %s10 = ssub.s32 1, %s8
  %s11 = scalar_select 0, %s10, %s8
  $region1: #{_forward_impl.1} parent=0
    #allocation2 [shape = 'u8[36864]{0}', space=vmem, size = 0x9000, scoped, tag = 'input window, operand 1, single buffered']
    #allocation3 [shape = 's32[1]{0}', space=sflag, size = 0x4, scoped, tag = 'scoped memory for _forward_impl.1']
    #allocation4 [shape = 's32[1]{0}', space=sflag, size = 0x4, scoped, tag = 'scoped memory for _forward_impl.1']
    #allocation5 [shape = 'u8[1024]{0}', space=vmem, size = 0x400, scoped, tag = 'output window, operand 0, single buffered']
    #allocation6 [shape = 'u8[1024]{0}', space=vmem, size = 0x400, scoped, tag = 'output window, operand 1, single buffered']
    #allocation7 [shape = 's32[1]{0}', space=sflag, size = 0x4, scoped, tag = 'scoped memory for _forward_impl.1']
    #allocation8 [shape = 'u8[1024]{0}', space=vmem, size = 0x400, scoped, tag = 'output window, operand 2, single buffered']
    %12 = vsyncpa [#allocation3], 0
    %13 = vsyncpa [#allocation4], 0
    %14 = vsyncpa [#allocation7], 0
    // Predicated region
    $region2: #{_forward_impl.1} parent=1 // pred_check
      _
    $region3: #{_forward_impl.1} parent=1 // pred_check_branch
      %16 = sbr.rel (0) target = $region5
    $region4: #{_forward_impl.1} parent=1 // pred_region
      _
    $region5: #{_forward_impl.1} parent=1 // pred_fallthru
      _
    // Predicated region
    $region6: #{_forward_impl.1} parent=1 // pred_check
      _
    $region7: #{_forward_impl.1} parent=1 // pred_check_branch
      %18 = sbr.rel (0) target = $region9
    $region8: #{_forward_impl.1} parent=1 // pred_region
      %20 = vsyncadd [#allocation3], 0
      %s21 = sshll.u32 %s1, 4
      %s22 = int_to_ptr.hbm [resolvable:$true] %s21
      %s23 = sshll.u32 [#allocation2], 4
      %s24 = int_to_ptr.vmem [resolvable:$true] %s23
      %29 = dma.hbm_to_vmem [thread:$0]  %s22, 1152, %s24, [#allocation3], 128, 128, 8
    $region9: #{_forward_impl.1} parent=1 // pred_fallthru
      _
    // Predicated region
    $region10: #{_forward_impl.1} parent=1 // pred_check
      _
    $region11: #{_forward_impl.1} parent=1 // pred_check_branch
      %31 = sbr.rel (0) target = $region13
    $region12: #{_forward_impl.1} parent=1 // pred_region
      _
    $region13: #{_forward_impl.1} parent=1 // pred_fallthru
      _
    // Predicated region
    $region14: #{_forward_impl.1} parent=1 // pred_check
      _
    $region15: #{_forward_impl.1} parent=1 // pred_check_branch
      %33 = sbr.rel (0) target = $region17
    $region16: #{_forward_impl.1} parent=1 // pred_region
      _
    $region17: #{_forward_impl.1} parent=1 // pred_fallthru
      _
    // Predicated region
    $region18: #{_forward_impl.1} parent=1 // pred_check
      _
    $region19: #{_forward_impl.1} parent=1 // pred_check_branch
      %35 = sbr.rel (0) target = $region21
    $region20: #{_forward_impl.1} parent=1 // pred_region
      %37 = dma.done [#allocation3], 1152
    $region21: #{_forward_impl.1} parent=1 // pred_fallthru
      _
    %v38 = vld [vmem:[#allocation2] sm:$0xff]
    %v39 = vld [vmem:[#allocation2 + $0x8] sm:$0xff]
    %v40 = vld [vmem:[#allocation2 + $0x10] sm:$0xff]
    %v41 = vld [vmem:[#allocation2 + $0x18] sm:$0xff]
    %v42 = vld [vmem:[#allocation2 + $0x20] sm:$0xff]
    %v43 = vld [vmem:[#allocation2 + $0x28] sm:$0xff]
    %v44 = vld [vmem:[#allocation2 + $0x30] sm:$0xff]
    %v45 = vld [vmem:[#allocation2 + $0x38] sm:$0xff]
    %v46 = vld [vmem:[#allocation2 + $0x40] sm:$0x1]
    %v47 = vld [vmem:[#allocation2 + $0x41] sm:$0x1]
    %v48 = vld [vmem:[%s0] sm:$0xff]
    %v49 = vld [vmem:[%s0 + $0x8] sm:$0xff]
    %v50 = vlaneseq
    %v51 = vand.u32 %v50, 127
    %52 = vset.pattern.permute.xlu0 0
    %53 = vperm.xlu0 %52, %v48
    %v54 = vpop.permute.xlu0 %53
    %55 = vset.pattern.permute.xlu0 0
    %56 = vperm.xlu0 %55, %v49
    %v57 = vpop.permute.xlu0 %56
    %vm58 = vcmp.eq.s32.totalorder %v54, %v51
    %vm59 = vcmp.eq.s32.totalorder %v57, %v51
    %v60 = vsel %vm58, 1, 0
    %v61 = vsel %vm59, 1, 0
    %v62 = vcvt.s32.f32 %v60
    %v63 = vcvt.s32.f32 %v61
    %vm64 = vcmask 130048
    %v66 = vsel %vm64, %v62, 0
    %v69 = vsel %vm64, %v63, 0
    %71 = vmatpush.msra.mxu0 0.0
    %72 = vmatpush.msra.mxu0 0.0
    %73 = vmatpush.msra.mxu0 0.0
    %74 = vmatpush.msra.mxu0 0.0
    %75 = vmatpush.msra.mxu0 0.0
    %76 = vmatpush.msra.mxu0 0.0
    %77 = vmatpush.msra.mxu0 0.0
    %78 = vmatpush.msra.mxu0 0.0
    %79 = vmatpush.msra.mxu0 0.0
    %80 = vmatpush.msra.mxu0 0.0
    %81 = vmatpush.msra.mxu0 0.0
    %82 = vmatpush.msra.mxu0 0.0
    %83 = vmatpush.msra.mxu0 0.0
    %84 = vmatpush.msra.mxu0 0.0
    %85 = vmatpush.msra.mxu0 %v39
    %86 = vmatpush.msra.mxu0 %v38
    %87 = vmatmul.f32.gmra.mxu0 %v66
    %v88 = vpop.f32.mrf.mxu0
    %v89 = vadd.f32 0.0, %v88
    %90 = vmatmul.f32.gmra.mxu0 %v69
    %v91 = vpop.f32.mrf.mxu0
    %v92 = vadd.f32 0.0, %v91
    %93 = vdwg.mxu0
    %v96 = vrot.slane %v89, 2
    %v97 = vrot.slane %v89, 4
    %v98 = vrot.slane %v89, 6
    %v99 = vrot.slane %v92, 2
    %v100 = vrot.slane %v92, 4
    %v101 = vrot.slane %v92, 6
    %v108 = vld [vmem:[%s2] sm:$0x3]
    %v109 = vld [vmem:[%s3] sm:$0x3]
    %vm110 = vcmask 64512
    %v112 = vsel %vm110, %v108, 0
    %114 = vmatpush.msra.mxu0 0.0
    %115 = vmatpush.msra.mxu0 0.0
    %116 = vmatpush.msra.mxu0 0.0
    %117 = vmatpush.msra.mxu0 0.0
    %118 = vmatpush.msra.mxu0 0.0
    %119 = vmatpush.msra.mxu0 0.0
    %120 = vmatpush.msra.mxu0 0.0
    %121 = vmatpush.msra.mxu0 0.0
    %122 = vmatpush.msra.mxu0 0.0
    %123 = vmatpush.msra.mxu0 0.0
    %124 = vmatpush.msra.mxu0 0.0
    %125 = vmatpush.msra.mxu0 0.0
    %126 = vmatpush.msra.mxu0 0.0
    %127 = vmatpush.msra.mxu0 0.0
    %128 = vmatpush.msra.mxu0 0.0
    %129 = vmatpush.msra.mxu0 %v40
    %130 = vmatmul.f32.gmra.mxu0 %v112
    %v131 = vpop.f32.mrf.mxu0
    %v132 = vadd.f32 0.0, %v131
    %133 = vdwg.mxu0
    %v134 = vadd.f32 %v89, %v132
    %v135 = vxor.u32 %v134, 2147483648
    %v136 = vmul.f32 %v135, 1.442695
    %v137 = vpow.pop %v136
    %v138 = vadd.f32 %v137, 1.0
    %v139 = vrcp.pop %v138
    %v140 = vmul.f32 %v138, %v139
    %v141 = vsub.f32 1.0, %v140
    %v142 = vmul.f32 %v139, %v141
    %v143 = vadd.f32 %v139, %v142
    %vm144 = vweird.f32 %v138
    %vm145 = vweird.f32 %v139
    %vm146 = vmor %vm144, %vm145
    %v147 = vsel %vm146, %v139, %v143
    %v148 = vand.u32 2147483647, %v138
    %vm149 = vcmp.eq.f32.partialorder %v148, 8.507059e+37
    %v150 = vand.u32 %v138, 2147483648
    %v151 = vor.u32 1.1754944e-38, %v150
    %v152 = vsel %vm149, %v151, %v147
    %v153 = vmul.f32 1.0, %v152
    %v154 = vtanh.pop %v134
    %156 = vrot.lane.b32.xlu0 %v109, 8
    %v157 = vpop.permute.xlu0 %156
    %v159 = vmul.f32 %v153, %v157
    %161 = vrot.lane.b32.xlu0 %v154, 112
    %v162 = vpop.permute.xlu0 %161
    %v164 = vmul.f32 %v153, %v162
    %166 = vrot.lane.b32.xlu0 %v164, 8
    %v167 = vpop.permute.xlu0 %166
    %v169 = vadd.f32 %v159, %v167
    %v170 = vtanh.pop %v169
    %172 = vrot.lane.b32.xlu0 %v170, 16
    %v173 = vpop.permute.xlu0 %172
    %v175 = vmul.f32 %v153, %v173
    %177 = vst [vmem:[#allocation1] ss:$4 sm:$0xff] %v175
    %v178 = vld.sshfl [vmem:[#allocation1] sm:$0xff pattern:$0x73625140]
    %179 = vrot.lane.b32.xlu0 %v178, 104
    %v180 = vpop.permute.xlu0 %179
    %v181 = vsel %vm110, %v180, 0
    %183 = vmatpush.msra.mxu0 0.0
    %184 = vmatpush.msra.mxu0 0.0
    %185 = vmatpush.msra.mxu0 0.0
    %186 = vmatpush.msra.mxu0 0.0
    %187 = vmatpush.msra.mxu0 0.0
    %188 = vmatpush.msra.mxu0 0.0
    %189 = vmatpush.msra.mxu0 0.0
    %190 = vmatpush.msra.mxu0 0.0
    %191 = vmatpush.msra.mxu0 0.0
    %192 = vmatpush.msra.mxu0 0.0
    %193 = vmatpush.msra.mxu0 0.0
    %194 = vmatpush.msra.mxu0 0.0
    %195 = vmatpush.msra.mxu0 0.0
    %196 = vmatpush.msra.mxu0 0.0
    %197 = vmatpush.msra.mxu0 0.0
    %198 = vmatpush.msra.mxu0 %v40
    %199 = vmatmul.f32.gmra.mxu0 %v181
    %v200 = vpop.f32.mrf.mxu0
    %v201 = vadd.f32 0.0, %v200
    %202 = vdwg.mxu0
    %v203 = vadd.f32 %v96, %v201
    %v204 = vxor.u32 %v203, 2147483648
    %v205 = vmul.f32 %v204, 1.442695
    %v206 = vpow.pop %v205
    %v207 = vadd.f32 %v206, 1.0
    %v208 = vrcp.pop %v207
    %v209 = vmul.f32 %v207, %v208
    %v210 = vsub.f32 1.0, %v209
    %v211 = vmul.f32 %v208, %v210
    %v212 = vadd.f32 %v208, %v211
    %vm213 = vweird.f32 %v207
    %vm214 = vweird.f32 %v208
    %vm215 = vmor %vm213, %vm214
    %v216 = vsel %vm215, %v208, %v212
    %v217 = vand.u32 2147483647, %v207
    %vm218 = vcmp.eq.f32.partialorder %v217, 8.507059e+37
    %v219 = vand.u32 %v207, 2147483648
    %v220 = vor.u32 1.1754944e-38, %v219
    %v221 = vsel %vm218, %v220, %v216
    %v222 = vmul.f32 1.0, %v221
    %v223 = vtanh.pop %v203
    %v224 = vmul.f32 %v222, %v169
    %226 = vrot.lane.b32.xlu0 %v223, 112
    %v227 = vpop.permute.xlu0 %226
    %v229 = vmul.f32 %v222, %v227
    %231 = vrot.lane.b32.xlu0 %v229, 8
    %v232 = vpop.permute.xlu0 %231
    %v234 = vadd.f32 %v224, %v232
    %v235 = vtanh.pop %v234
    %237 = vrot.lane.b32.xlu0 %v235, 16
    %v238 = vpop.permute.xlu0 %237
    %v240 = vmul.f32 %v222, %v238
    %242 = vst [vmem:[#allocation1] ss:$4 sm:$0xff] %v240
    %v243 = vld.sshfl [vmem:[#allocation1] sm:$0xff pattern:$0x73625140]
    %244 = vrot.lane.b32.xlu0 %v243, 104
    %v245 = vpop.permute.xlu0 %244
    %v246 = vsel %vm110, %v245, 0
    %248 = vmatpush.msra.mxu0 0.0
    %249 = vmatpush.msra.mxu0 0.0
    %250 = vmatpush.msra.mxu0 0.0
    %251 = vmatpush.msra.mxu0 0.0
    %252 = vmatpush.msra.mxu0 0.0
    %253 = vmatpush.msra.mxu0 0.0
    %254 = vmatpush.msra.mxu0 0.0
    %255 = vmatpush.msra.mxu0 0.0
    %256 = vmatpush.msra.mxu0 0.0
    %257 = vmatpush.msra.mxu0 0.0
    %258 = vmatpush.msra.mxu0 0.0
    %259 = vmatpush.msra.mxu0 0.0
    %260 = vmatpush.msra.mxu0 0.0
    %261 = vmatpush.msra.mxu0 0.0
    %262 = vmatpush.msra.mxu0 0.0
    %263 = vmatpush.msra.mxu0 %v40
    %264 = vmatmul.f32.gmra.mxu0 %v246
    %v265 = vpop.f32.mrf.mxu0
    %v266 = vadd.f32 0.0, %v265
    %267 = vdwg.mxu0
    %v268 = vadd.f32 %v97, %v266
    %v269 = vxor.u32 %v268, 2147483648
    %v270 = vmul.f32 %v269, 1.442695
    %v271 = vpow.pop %v270
    %v272 = vadd.f32 %v271, 1.0
    %v273 = vrcp.pop %v272
    %v274 = vmul.f32 %v272, %v273
    %v275 = vsub.f32 1.0, %v274
    %v276 = vmul.f32 %v273, %v275
    %v277 = vadd.f32 %v273, %v276
    %vm278 = vweird.f32 %v272
    %vm279 = vweird.f32 %v273
    %vm280 = vmor %vm278, %vm279
    %v281 = vsel %vm280, %v273, %v277
    %v282 = vand.u32 2147483647, %v272
    %vm283 = vcmp.eq.f32.partialorder %v282, 8.507059e+37
    %v284 = vand.u32 %v272, 2147483648
    %v285 = vor.u32 1.1754944e-38, %v284
    %v286 = vsel %vm283, %v285, %v281
    %v287 = vmul.f32 1.0, %v286
    %v288 = vtanh.pop %v268
    %v289 = vmul.f32 %v287, %v234
    %291 = vrot.lane.b32.xlu0 %v288, 112
    %v292 = vpop.permute.xlu0 %291
    %v294 = vmul.f32 %v287, %v292
    %296 = vrot.lane.b32.xlu0 %v294, 8
    %v297 = vpop.permute.xlu0 %296
    %v299 = vadd.f32 %v289, %v297
    %v300 = vtanh.pop %v299
    %302 = vrot.lane.b32.xlu0 %v300, 16
    %v303 = vpop.permute.xlu0 %302
    %v305 = vmul.f32 %v287, %v303
    %307 = vst [vmem:[#allocation1] ss:$4 sm:$0xff] %v305
    %v308 = vld.sshfl [vmem:[#allocation1] sm:$0xff pattern:$0x73625140]
    %309 = vrot.lane.b32.xlu0 %v308, 104
    %v310 = vpop.permute.xlu0 %309
    %v311 = vsel %vm110, %v310, 0
    %313 = vmatpush.msra.mxu0 0.0
    %314 = vmatpush.msra.mxu0 0.0
    %315 = vmatpush.msra.mxu0 0.0
    %316 = vmatpush.msra.mxu0 0.0
    %317 = vmatpush.msra.mxu0 0.0
    %318 = vmatpush.msra.mxu0 0.0
    %319 = vmatpush.msra.mxu0 0.0
    %320 = vmatpush.msra.mxu0 0.0
    %321 = vmatpush.msra.mxu0 0.0
    %322 = vmatpush.msra.mxu0 0.0
    %323 = vmatpush.msra.mxu0 0.0
    %324 = vmatpush.msra.mxu0 0.0
    %325 = vmatpush.msra.mxu0 0.0
    %326 = vmatpush.msra.mxu0 0.0
    %327 = vmatpush.msra.mxu0 0.0
    %328 = vmatpush.msra.mxu0 %v40
    %329 = vmatmul.f32.gmra.mxu0 %v311
    %v330 = vpop.f32.mrf.mxu0
    %v331 = vadd.f32 0.0, %v330
    %332 = vdwg.mxu0
    %v333 = vadd.f32 %v98, %v331
    %v334 = vxor.u32 %v333, 2147483648
    %v335 = vmul.f32 %v334, 1.442695
    %v336 = vpow.pop %v335
    %v337 = vadd.f32 %v336, 1.0
    %v338 = vrcp.pop %v337
    %v339 = vmul.f32 %v337, %v338
    %v340 = vsub.f32 1.0, %v339
    %v341 = vmul.f32 %v338, %v340
    %v342 = vadd.f32 %v338, %v341
    %vm343 = vweird.f32 %v337
    %vm344 = vweird.f32 %v338
    %vm345 = vmor %vm343, %vm344
    %v346 = vsel %vm345, %v338, %v342
    %v347 = vand.u32 2147483647, %v337
    %vm348 = vcmp.eq.f32.partialorder %v347, 8.507059e+37
    %v349 = vand.u32 %v337, 2147483648
    %v350 = vor.u32 1.1754944e-38, %v349
    %v351 = vsel %vm348, %v350, %v346
    %v352 = vmul.f32 1.0, %v351
    %v353 = vtanh.pop %v333
    %v354 = vmul.f32 %v352, %v299
    %356 = vrot.lane.b32.xlu0 %v353, 112
    %v357 = vpop.permute.xlu0 %356
    %v359 = vmul.f32 %v352, %v357
    %361 = vrot.lane.b32.xlu0 %v359, 8
    %v362 = vpop.permute.xlu0 %361
    %v364 = vadd.f32 %v354, %v362
    %v365 = vtanh.pop %v364
    %367 = vrot.lane.b32.xlu0 %v365, 16
    %v368 = vpop.permute.xlu0 %367
    %v370 = vmul.f32 %v352, %v368
    %372 = vst [vmem:[#allocation1] ss:$4 sm:$0xff] %v370
    %v373 = vld.sshfl [vmem:[#allocation1] sm:$0xff pattern:$0x73625140]
    %374 = vrot.lane.b32.xlu0 %v373, 104
    %v375 = vpop.permute.xlu0 %374
    %v376 = vsel %vm110, %v375, 0
    %378 = vmatpush.msra.mxu0 0.0
    %379 = vmatpush.msra.mxu0 0.0
    %380 = vmatpush.msra.mxu0 0.0
    %381 = vmatpush.msra.mxu0 0.0
    %382 = vmatpush.msra.mxu0 0.0
    %383 = vmatpush.msra.mxu0 0.0
    %384 = vmatpush.msra.mxu0 0.0
    %385 = vmatpush.msra.mxu0 0.0
    %386 = vmatpush.msra.mxu0 0.0
    %387 = vmatpush.msra.mxu0 0.0
    %388 = vmatpush.msra.mxu0 0.0
    %389 = vmatpush.msra.mxu0 0.0
    %390 = vmatpush.msra.mxu0 0.0
    %391 = vmatpush.msra.mxu0 0.0
    %392 = vmatpush.msra.mxu0 0.0
    %393 = vmatpush.msra.mxu0 %v40
    %394 = vmatmul.f32.gmra.mxu0 %v376
    %v395 = vpop.f32.mrf.mxu0
    %v396 = vadd.f32 0.0, %v395
    %397 = vdwg.mxu0
    %v398 = vadd.f32 %v92, %v396
    %v399 = vxor.u32 %v398, 2147483648
    %v400 = vmul.f32 %v399, 1.442695
    %v401 = vpow.pop %v400
    %v402 = vadd.f32 %v401, 1.0
    %v403 = vrcp.pop %v402
    %v404 = vmul.f32 %v402, %v403
    %v405 = vsub.f32 1.0, %v404
    %v406 = vmul.f32 %v403, %v405
    %v407 = vadd.f32 %v403, %v406
    %vm408 = vweird.f32 %v402
    %vm409 = vweird.f32 %v403
    %vm410 = vmor %vm408, %vm409
    %v411 = vsel %vm410, %v403, %v407
    %v412 = vand.u32 2147483647, %v402
    %vm413 = vcmp.eq.f32.partialorder %v412, 8.507059e+37
    %v414 = vand.u32 %v402, 2147483648
    %v415 = vor.u32 1.1754944e-38, %v414
    %v416 = vsel %vm413, %v415, %v411
    %v417 = vmul.f32 1.0, %v416
    %v418 = vtanh.pop %v398
    %v419 = vmul.f32 %v417, %v364
    %421 = vrot.lane.b32.xlu0 %v418, 112
    %v422 = vpop.permute.xlu0 %421
    %v424 = vmul.f32 %v417, %v422
    %426 = vrot.lane.b32.xlu0 %v424, 8
    %v427 = vpop.permute.xlu0 %426
    %v429 = vadd.f32 %v419, %v427
    %v430 = vtanh.pop %v429
    %432 = vrot.lane.b32.xlu0 %v430, 16
    %v433 = vpop.permute.xlu0 %432
    %v435 = vmul.f32 %v417, %v433
    %437 = vst [vmem:[#allocation1] ss:$4 sm:$0xff] %v435
    %v438 = vld.sshfl [vmem:[#allocation1] sm:$0xff pattern:$0x73625140]
    %439 = vrot.lane.b32.xlu0 %v438, 104
    %v440 = vpop.permute.xlu0 %439
    %v441 = vsel %vm110, %v440, 0
    %443 = vmatpush.msra.mxu0 0.0
    %444 = vmatpush.msra.mxu0 0.0
    %445 = vmatpush.msra.mxu0 0.0
    %446 = vmatpush.msra.mxu0 0.0
    %447 = vmatpush.msra.mxu0 0.0
    %448 = vmatpush.msra.mxu0 0.0
    %449 = vmatpush.msra.mxu0 0.0
    %450 = vmatpush.msra.mxu0 0.0
    %451 = vmatpush.msra.mxu0 0.0
    %452 = vmatpush.msra.mxu0 0.0
    %453 = vmatpush.msra.mxu0 0.0
    %454 = vmatpush.msra.mxu0 0.0
    %455 = vmatpush.msra.mxu0 0.0
    %456 = vmatpush.msra.mxu0 0.0
    %457 = vmatpush.msra.mxu0 0.0
    %458 = vmatpush.msra.mxu0 %v40
    %459 = vmatmul.f32.gmra.mxu0 %v441
    %v460 = vpop.f32.mrf.mxu0
    %v461 = vadd.f32 0.0, %v460
    %462 = vdwg.mxu0
    %v463 = vadd.f32 %v99, %v461
    %v464 = vxor.u32 %v463, 2147483648
    %v465 = vmul.f32 %v464, 1.442695
    %v466 = vpow.pop %v465
    %v467 = vadd.f32 %v466, 1.0
    %v468 = vrcp.pop %v467
    %v469 = vmul.f32 %v467, %v468
    %v470 = vsub.f32 1.0, %v469
    %v471 = vmul.f32 %v468, %v470
    %v472 = vadd.f32 %v468, %v471
    %vm473 = vweird.f32 %v467
    %vm474 = vweird.f32 %v468
    %vm475 = vmor %vm473, %vm474
    %v476 = vsel %vm475, %v468, %v472
    %v477 = vand.u32 2147483647, %v467
    %vm478 = vcmp.eq.f32.partialorder %v477, 8.507059e+37
    %v479 = vand.u32 %v467, 2147483648
    %v480 = vor.u32 1.1754944e-38, %v479
    %v481 = vsel %vm478, %v480, %v476
    %v482 = vmul.f32 1.0, %v481
    %v483 = vtanh.pop %v463
    %v484 = vmul.f32 %v482, %v429
    %486 = vrot.lane.b32.xlu0 %v483, 112
    %v487 = vpop.permute.xlu0 %486
    %v489 = vmul.f32 %v482, %v487
    %491 = vrot.lane.b32.xlu0 %v489, 8
    %v492 = vpop.permute.xlu0 %491
    %v494 = vadd.f32 %v484, %v492
    %v495 = vtanh.pop %v494
    %497 = vrot.lane.b32.xlu0 %v495, 16
    %v498 = vpop.permute.xlu0 %497
    %v500 = vmul.f32 %v482, %v498
    %502 = vst [vmem:[#allocation1] ss:$4 sm:$0xff] %v500
    %v503 = vld.sshfl [vmem:[#allocation1] sm:$0xff pattern:$0x73625140]
    %504 = vrot.lane.b32.xlu0 %v503, 104
    %v505 = vpop.permute.xlu0 %504
    %v506 = vsel %vm110, %v505, 0
    %508 = vmatpush.msra.mxu0 0.0
    %509 = vmatpush.msra.mxu0 0.0
    %510 = vmatpush.msra.mxu0 0.0
    %511 = vmatpush.msra.mxu0 0.0
    %512 = vmatpush.msra.mxu0 0.0
    %513 = vmatpush.msra.mxu0 0.0
    %514 = vmatpush.msra.mxu0 0.0
    %515 = vmatpush.msra.mxu0 0.0
    %516 = vmatpush.msra.mxu0 0.0
    %517 = vmatpush.msra.mxu0 0.0
    %518 = vmatpush.msra.mxu0 0.0
    %519 = vmatpush.msra.mxu0 0.0
    %520 = vmatpush.msra.mxu0 0.0
    %521 = vmatpush.msra.mxu0 0.0
    %522 = vmatpush.msra.mxu0 0.0
    %523 = vmatpush.msra.mxu0 %v40
    %524 = vmatmul.f32.gmra.mxu0 %v506
    %v525 = vpop.f32.mrf.mxu0
    %v526 = vadd.f32 0.0, %v525
    %527 = vdwg.mxu0
    %v528 = vadd.f32 %v100, %v526
    %v529 = vxor.u32 %v528, 2147483648
    %v530 = vmul.f32 %v529, 1.442695
    %v531 = vpow.pop %v530
    %v532 = vadd.f32 %v531, 1.0
    %v533 = vrcp.pop %v532
    %v534 = vmul.f32 %v532, %v533
    %v535 = vsub.f32 1.0, %v534
    %v536 = vmul.f32 %v533, %v535
    %v537 = vadd.f32 %v533, %v536
    %vm538 = vweird.f32 %v532
    %vm539 = vweird.f32 %v533
    %vm540 = vmor %vm538, %vm539
    %v541 = vsel %vm540, %v533, %v537
    %v542 = vand.u32 2147483647, %v532
    %vm543 = vcmp.eq.f32.partialorder %v542, 8.507059e+37
    %v544 = vand.u32 %v532, 2147483648
    %v545 = vor.u32 1.1754944e-38, %v544
    %v546 = vsel %vm543, %v545, %v541
    %v547 = vmul.f32 1.0, %v546
    %v548 = vtanh.pop %v528
    %v549 = vmul.f32 %v547, %v494
    %551 = vrot.lane.b32.xlu0 %v548, 112
    %v552 = vpop.permute.xlu0 %551
    %v554 = vmul.f32 %v547, %v552
    %556 = vrot.lane.b32.xlu0 %v554, 8
    %v557 = vpop.permute.xlu0 %556
    %v559 = vadd.f32 %v549, %v557
    %v560 = vtanh.pop %v559
    %562 = vrot.lane.b32.xlu0 %v560, 16
    %v563 = vpop.permute.xlu0 %562
    %v565 = vmul.f32 %v547, %v563
    %567 = vst [vmem:[#allocation1] ss:$4 sm:$0xff] %v565
    %v568 = vld.sshfl [vmem:[#allocation1] sm:$0xff pattern:$0x73625140]
    %569 = vrot.lane.b32.xlu0 %v568, 104
    %v570 = vpop.permute.xlu0 %569
    %v571 = vsel %vm110, %v570, 0
    %573 = vmatpush.msra.mxu0 0.0
    %574 = vmatpush.msra.mxu0 0.0
    %575 = vmatpush.msra.mxu0 0.0
    %576 = vmatpush.msra.mxu0 0.0
    %577 = vmatpush.msra.mxu0 0.0
    %578 = vmatpush.msra.mxu0 0.0
    %579 = vmatpush.msra.mxu0 0.0
    %580 = vmatpush.msra.mxu0 0.0
    %581 = vmatpush.msra.mxu0 0.0
    %582 = vmatpush.msra.mxu0 0.0
    %583 = vmatpush.msra.mxu0 0.0
    %584 = vmatpush.msra.mxu0 0.0
    %585 = vmatpush.msra.mxu0 0.0
    %586 = vmatpush.msra.mxu0 0.0
    %587 = vmatpush.msra.mxu0 0.0
    %588 = vmatpush.msra.mxu0 %v40
    %589 = vmatmul.f32.gmra.mxu0 %v571
    %v590 = vpop.f32.mrf.mxu0
    %v591 = vadd.f32 0.0, %v590
    %592 = vdwg.mxu0
    %v593 = vadd.f32 %v101, %v591
    %v594 = vxor.u32 %v593, 2147483648
    %v595 = vmul.f32 %v594, 1.442695
    %v596 = vpow.pop %v595
    %v597 = vadd.f32 %v596, 1.0
    %v598 = vrcp.pop %v597
    %v599 = vmul.f32 %v597, %v598
    %v600 = vsub.f32 1.0, %v599
    %v601 = vmul.f32 %v598, %v600
    %v602 = vadd.f32 %v598, %v601
    %vm603 = vweird.f32 %v597
    %vm604 = vweird.f32 %v598
    %vm605 = vmor %vm603, %vm604
    %v606 = vsel %vm605, %v598, %v602
    %v607 = vand.u32 2147483647, %v597
    %vm608 = vcmp.eq.f32.partialorder %v607, 8.507059e+37
    %v609 = vand.u32 %v597, 2147483648
    %v610 = vor.u32 1.1754944e-38, %v609
    %v611 = vsel %vm608, %v610, %v606
    %v612 = vmul.f32 1.0, %v611
    %v613 = vtanh.pop %v593
    %v614 = vmul.f32 %v612, %v559
    %616 = vrot.lane.b32.xlu0 %v613, 112
    %v617 = vpop.permute.xlu0 %616
    %v619 = vmul.f32 %v612, %v617
    %621 = vrot.lane.b32.xlu0 %v619, 8
    %v622 = vpop.permute.xlu0 %621
    %v624 = vadd.f32 %v614, %v622
    %v625 = vtanh.pop %v624
    %627 = vrot.lane.b32.xlu0 %v625, 16
    %v628 = vpop.permute.xlu0 %627
    %v630 = vmul.f32 %v612, %v628
    %v631 = vperm.slane %v46, 0
    %633 = vst [vmem:[#allocation1] ss:$4 sm:$0xff] %v630
    %v634 = vld.sshfl [vmem:[#allocation1] sm:$0xff pattern:$0x73625140]
    %635 = vrot.lane.b32.xlu0 %v634, 104
    %v636 = vpop.permute.xlu0 %635
    %v637 = vsel %vm110, %v636, 0
    %639 = vmatpush.msra.mxu0 0.0
    %640 = vmatpush.msra.mxu0 0.0
    %641 = vmatpush.msra.mxu0 0.0
    %642 = vmatpush.msra.mxu0 0.0
    %643 = vmatpush.msra.mxu0 0.0
    %644 = vmatpush.msra.mxu0 0.0
    %645 = vmatpush.msra.mxu0 0.0
    %646 = vmatpush.msra.mxu0 0.0
    %647 = vmatpush.msra.mxu0 0.0
    %648 = vmatpush.msra.mxu0 0.0
    %649 = vmatpush.msra.mxu0 0.0
    %650 = vmatpush.msra.mxu0 0.0
    %651 = vmatpush.msra.mxu0 0.0
    %652 = vmatpush.msra.mxu0 0.0
    %653 = vmatpush.msra.mxu0 0.0
    %654 = vmatpush.msra.mxu0 %v41
    %655 = vmatmul.f32.gmra.mxu0 %v637
    %v656 = vpop.f32.mrf.mxu0
    %v657 = vadd.f32 %v631, %v656
    %658 = vdwg.mxu0
    %v659 = vperm.slane %v47, 0
    %vm660 = vcmask 261120
    %v662 = vsel %vm660, %v657, 0
    %664 = vmatpush.msra.mxu0 0.0
    %665 = vmatpush.msra.mxu0 0.0
    %666 = vmatpush.msra.mxu0 0.0
    %667 = vmatpush.msra.mxu0 0.0
    %668 = vmatpush.msra.mxu0 0.0
    %669 = vmatpush.msra.mxu0 0.0
    %670 = vmatpush.msra.mxu0 0.0
    %671 = vmatpush.msra.mxu0 0.0
    %672 = vmatpush.msra.mxu0 0.0
    %673 = vmatpush.msra.mxu0 0.0
    %674 = vmatpush.msra.mxu0 0.0
    %675 = vmatpush.msra.mxu0 0.0
    %676 = vmatpush.msra.mxu0 %v45
    %677 = vmatpush.msra.mxu0 %v44
    %678 = vmatpush.msra.mxu0 %v43
    %679 = vmatpush.msra.mxu0 %v42
    %680 = vmatmul.f32.gmra.mxu0 %v662
    %v681 = vpop.f32.mrf.mxu0
    %v682 = vadd.f32 %v659, %v681
    %683 = vdwg.mxu0
    %684 = vst [vmem:[#allocation5] sm:$0x3] %v682
    %685 = vst [vmem:[#allocation1] ss:$4 sm:$0xff] %v630
    %v686 = vld.sshfl [vmem:[#allocation1] sm:$0xff pattern:$0x73625140]
    %687 = vrot.lane.b32.xlu0 %v686, 104
    %v688 = vpop.permute.xlu0 %687
    %vm690 = vcmask 58368
    %691 = vst.msk [vmem:[#allocation6] sm:$0x3] %vm690, %v688
    %693 = vst [vmem:[#allocation1] ss:$4 sm:$0xff] %v624
    %v694 = vld.sshfl [vmem:[#allocation1] sm:$0xff pattern:$0x73625140]
    %695 = vrot.lane.b32.xlu0 %v694, 120
    %v696 = vpop.permute.xlu0 %695
    %698 = vst.msk [vmem:[#allocation8] sm:$0x3] %vm690, %v696
    // Predicated region
    $region22: #{_forward_impl.1} parent=1 // pred_check
      _
    $region23: #{_forward_impl.1} parent=1 // pred_check_branch
      %700 = sbr.rel (0) target = $region25
    $region24: #{_forward_impl.1} parent=1 // pred_region
      %702 = vsyncadd [#allocation4], 0
      %s704 = sshll.u32 [#allocation5], 4
      %s705 = int_to_ptr.vmem [resolvable:$true] %s704
      %s706 = sshll.u32 %s4, 4
      %s707 = int_to_ptr.hbm [resolvable:$true] %s706
      %709 = dma.vmem_to_hbm [thread:$0]  %s705, 32, %s707, [#allocation4]
    $region25: #{_forward_impl.1} parent=1 // pred_fallthru
      _
    // Predicated region
    $region26: #{_forward_impl.1} parent=1 // pred_check
      _
    $region27: #{_forward_impl.1} parent=1 // pred_check_branch
      %711 = sbr.rel (0) target = $region29
    $region28: #{_forward_impl.1} parent=1 // pred_region
      %713 = vsyncadd [#allocation7], 0
      %s715 = sshll.u32 [#allocation6], 4
      %s716 = int_to_ptr.vmem [resolvable:$true] %s715
      %s717 = sshll.u32 %s5, 4
      %s718 = int_to_ptr.hbm [resolvable:$true] %s717
      %720 = dma.vmem_to_hbm [thread:$0]  %s716, 32, %s718, [#allocation7]
    $region29: #{_forward_impl.1} parent=1 // pred_fallthru
      _
    // Predicated region
    $region30: #{_forward_impl.1} parent=1 // pred_check
      _
    $region31: #{_forward_impl.1} parent=1 // pred_check_branch
      %722 = sbr.rel (0) target = $region33
    $region32: #{_forward_impl.1} parent=1 // pred_region
      %724 = vsyncadd [#allocation7], 0
      %s726 = sshll.u32 [#allocation8], 4
      %s727 = int_to_ptr.vmem [resolvable:$true] %s726
      %s728 = sshll.u32 %s6, 4
      %s729 = int_to_ptr.hbm [resolvable:$true] %s728
      %731 = dma.vmem_to_hbm [thread:$0]  %s727, 32, %s729, [#allocation7]
    $region33: #{_forward_impl.1} parent=1 // pred_fallthru
      _
    // Predicated region
    $region34: #{_forward_impl.1} parent=1 // pred_check
      _
    $region35: #{_forward_impl.1} parent=1 // pred_check_branch
      %733 = sbr.rel (0) target = $region37
    $region36: #{_forward_impl.1} parent=1 // pred_region
      %735 = dma.done [#allocation4], 32
    $region37: #{_forward_impl.1} parent=1 // pred_fallthru
      _
    // Predicated region
    $region38: #{_forward_impl.1} parent=1 // pred_check
      _
    $region39: #{_forward_impl.1} parent=1 // pred_check_branch
      %737 = sbr.rel (0) target = $region41
    $region40: #{_forward_impl.1} parent=1 // pred_region
      %739 = dma.done [#allocation7], 32
    $region41: #{_forward_impl.1} parent=1 // pred_fallthru
      _
    // Predicated region
    $region42: #{_forward_impl.1} parent=1 // pred_check
      _
    $region43: #{_forward_impl.1} parent=1 // pred_check_branch
      %741 = sbr.rel (0) target = $region45
    $region44: #{_forward_impl.1} parent=1 // pred_region
      %743 = dma.done [#allocation7], 32
    $region45: #{_forward_impl.1} parent=1 // pred_fallthru
      _
    %744 = vsyncpa [#allocation3], 1
    %745 = vsyncpa [#allocation4], 1
    %746 = vsyncpa [#allocation7], 1

</llo_original>
